<compile_context>
chip_gen: v5e
topology: v5e:2x2
jax: 0.10.0
libtpu: 0.0.40
codegen_flags: <defaults>
</compile_context>

<pallas_src>
from functools import partial

import jax
import jax.numpy as jnp
from jax.experimental import pallas as pl
from jax.experimental.pallas import tpu as pltpu

_WIDTHS = (4096, 2048, 1024, 512, 256, 128)   # preferred lane-dense slab widths
_TARGET_BLOCK_BYTES = 2 * 1024 * 1024         # ~2 MiB per in/out block buffer


def _slab_layout(n):
    """Pick a lane-dense (rows, width) view of n elements (+ tail pad)."""
    for w in _WIDTHS:
        if n % w == 0:
            return n // w, w, 0
    # Rare path: no multiple of 128 divides n -> pad the tail of one row.
    w = 512
    rows = -(-n // w)
    return rows, w, rows * w - n


def _block_rows(rows, width, itemsize):
    """Rows per grid block: big enough to amortize the ~0.35us per-step
    overhead, small enough that double-buffered in+out (+ f32 noise
    intermediates) stays well under the scoped-VMEM default, including
    v7x's smaller 64 MiB VMEM."""
    sub = 8 if itemsize >= 4 else (16 if itemsize == 2 else 32)
    br = max(1, _TARGET_BLOCK_BYTES // (width * itemsize))
    if br >= rows:
        return rows                        # single full-extent block is legal
    return max(sub, (br // sub) * sub)     # tiled: keep (sublane, 128) aligned


def _tpu_noise_kernel(seed_ref, x_ref, o_ref, *, sigma):
    # Per-block seed so every tile draws an independent noise stream.
    pltpu.prng_seed(seed_ref[0] + pl.program_id(0))
    z = pltpu.stateful_normal(x_ref.shape, jnp.float32)
    o_ref[...] = (x_ref[...].astype(jnp.float32)
                  + jnp.float32(sigma) * z).astype(o_ref.dtype)


def _add_noise_kernel(x_ref, n_ref, o_ref):
    o_ref[...] = x_ref[...] + n_ref[...]


def gaussian_noise(x, sigma, seed=0, training=True):
    """Pallas equivalent of GaussianNoise.forward.

    x: any-shaped float array (e.g. NCHW activations).
    sigma: Python float, noise std.
    seed: int, PRNG seed (deterministic).
    training: when False, returns x unchanged (matches nn.Module.eval()).
    """
    if not training:
        return x

    orig_shape = x.shape
    dtype = x.dtype
    itemsize = jnp.dtype(dtype).itemsize
    flat = x.reshape(-1)
    n = flat.shape[0]

    rows, width, pad = _slab_layout(n)
    if pad:
        # TODO(synk): rare non-128-divisible tail; pad copy only on this path.
        flat = jnp.pad(flat, (0, pad))
    slab = flat.reshape(rows, width)

    br = _block_rows(rows, width, itemsize)
    grid = (pl.cdiv(rows, br),)
    blk = pl.BlockSpec((br, width), lambda i: (i, 0))

    if jax.default_backend() == "tpu":
        seed_arr = jnp.asarray([seed], dtype=jnp.int32)
        cost = pl.CostEstimate(
            flops=2 * rows * width,
            transcendentals=rows * width,          # PRNG normal transform
            bytes_accessed=2 * rows * width * itemsize,
        )
        out = pl.pallas_call(
            partial(_tpu_noise_kernel, sigma=float(sigma)),
            out_shape=jax.ShapeDtypeStruct((rows, width), dtype),
            grid=grid,
            in_specs=[pl.BlockSpec(memory_space=pltpu.SMEM),  # seed scalar
                      blk],                                   # input slab tile
            out_specs=blk,
            compiler_params=pltpu.CompilerParams(
                dimension_semantics=("parallel",)),
            cost_estimate=cost,
        )(seed_arr, slab)
    else:
        # Non-TPU fallback: hardware PRNG primitives do not lower off-TPU,
        # so pre-generate the noise and do the add in a Pallas kernel.
        noise = (float(sigma)
                 * jax.random.normal(jax.random.PRNGKey(seed), (rows, width),
                                     dtype=jnp.float32)).astype(dtype)
        out = pl.pallas_call(
            _add_noise_kernel,
            out_shape=jax.ShapeDtypeStruct((rows, width), dtype),
            grid=grid,
            in_specs=[blk, blk],
            out_specs=blk,
        )(slab, noise)

    out = out.reshape(-1)
    if pad:
        out = out[:n]
    return out.reshape(orig_shape)


if __name__ == "__main__":
    key = jax.random.PRNGKey(0)
    # Small NCHW activation tensor, as a conv feature map would be.
    x = jax.random.normal(key, (2, 4, 16, 16), dtype=jnp.float32)
    sigma = 0.15

    # Training mode: input + Gaussian noise.
    y_train = jax.block_until_ready(
        gaussian_noise(x, sigma, seed=42, training=True))
    # Eval mode: identity.
    y_eval = jax.block_until_ready(
        gaussian_noise(x, sigma, seed=42, training=False))

    assert y_train.shape == x.shape and y_train.dtype == x.dtype
    assert bool(jnp.all(jnp.isfinite(y_train)))
    assert bool(jnp.all(y_eval == x))

    # Sanity-check the injected noise statistics (mean ~ 0, std ~ sigma).
    noise = y_train - x
    assert abs(float(jnp.mean(noise))) < 0.05
    assert abs(float(jnp.std(noise)) - sigma) < 0.05

    # Exercise the non-128-divisible (padded tail) path too.
    x2 = jax.random.normal(jax.random.PRNGKey(1), (3, 5, 7, 11),
                           dtype=jnp.float32)
    y2 = jax.block_until_ready(gaussian_noise(x2, sigma, seed=7, training=True))
    assert y2.shape == x2.shape and y2.dtype == x2.dtype
    assert bool(jnp.all(jnp.isfinite(y2)))

    print("KERNEL_OK")
</pallas_src>

<mosaic_0001>
module attributes {stable_mosaic.version = 11 : i64} {
  func.func @_add_noise_kernel(%arg0: i32, %arg1: memref<1x2048xf32, #tpu.memory_space<vmem>>, %arg2: memref<1x2048xf32, #tpu.memory_space<vmem>>, %arg3: memref<1x2048xf32, #tpu.memory_space<vmem>>) attributes {dimension_semantics = [#tpu.dimension_semantics<arbitrary>], iteration_bounds = array<i64: 1>, scalar_prefetch = 0 : i64, scratch_operands = 0 : i64, tpu.core_type = #tpu.core_type<tc>, window_params = [{transform_indices = @transform_0, window_bounds = array<i64: 1, 2048>}, {transform_indices = @transform_1, window_bounds = array<i64: 1, 2048>}, {transform_indices = @transform_2, window_bounds = array<i64: 1, 2048>}]} {
    %c0 = arith.constant 0 : index
    %c0_0 = arith.constant 0 : index
    %0 = vector.load %arg1[%c0, %c0_0] : memref<1x2048xf32, #tpu.memory_space<vmem>>, vector<1x2048xf32>
    %c0_1 = arith.constant 0 : index
    %c0_2 = arith.constant 0 : index
    %1 = vector.load %arg2[%c0_1, %c0_2] : memref<1x2048xf32, #tpu.memory_space<vmem>>, vector<1x2048xf32>
    %2 = arith.addf %0, %1 : vector<1x2048xf32>
    %c0_3 = arith.constant 0 : index
    %c0_4 = arith.constant 0 : index
    %3 = vector.load %arg3[%c0_3, %c0_4] : memref<1x2048xf32, #tpu.memory_space<vmem>>, vector<1x2048xf32>
    tpu.vector_store %arg3[%c0_3, %c0_4], %2 {strides = array<i32>} : memref<1x2048xf32, #tpu.memory_space<vmem>>, vector<1x2048xf32>,
    return
  }
  func.func @transform_0(%arg0: i32) -> (i32, i32) {
    %c0_i32 = arith.constant 0 : i32
    %c0_i32_0 = arith.constant 0 : i32
    return %arg0, %c0_i32 : i32, i32
  }
  func.func @transform_1(%arg0: i32) -> (i32, i32) {
    %c0_i32 = arith.constant 0 : i32
    %c0_i32_0 = arith.constant 0 : i32
    return %arg0, %c0_i32 : i32, i32
  }
  func.func @transform_2(%arg0: i32) -> (i32, i32) {
    %c0_i32 = arith.constant 0 : i32
    %c0_i32_0 = arith.constant 0 : i32
    return %arg0, %c0_i32 : i32, i32
  }
}

</mosaic_0001>

<llo_original>
// kernel: tpu_custom_call.1
$region0: #{tpu_custom_call.1}
  #allocation0 [shape = 'u32[]', space=smem, size = 0x4, offset = 0x4, fixed_abs, tag = 'smem constant byte address 0x4 - core index']
  #allocation1 [shape = 'u32[72,128]{1,0:T(1,128)}', space=vmem, size = 0x9000, scoped, tag = 'internal scratch']
  %s0 = inlined_call_operand.hbm [shape: f32[1,2048], index: 0, kind: input, shape index: {}]
  %s1 = inlined_call_operand.hbm [shape: f32[1,2048], index: 1, kind: input, shape index: {}]
  %s2 = inlined_call_operand.hbm [shape: f32[1,2048], index: 2, kind: output, shape index: {}]
  %s3 = sld [smem:[#allocation0]]
  $region26: #{tpu_custom_call.1} parent=0
    _
  %s5 = ssub.s32 1, %s3
  %s6 = scalar_select 0, %s5, %s3
  $region1: #{tpu_custom_call.1} parent=0
    #allocation2 [shape = 'u8[8192]{0}', space=vmem, size = 0x2000, scoped, tag = 'input window, operand 0, single buffered']
    #allocation3 [shape = 's32[1]{0}', space=sflag, size = 0x4, scoped, tag = 'scoped memory for tpu_custom_call.1']
    #allocation4 [shape = 's32[1]{0}', space=sflag, size = 0x4, scoped, tag = 'scoped memory for tpu_custom_call.1']
    #allocation5 [shape = 'u8[8192]{0}', space=vmem, size = 0x2000, scoped, tag = 'input window, operand 1, single buffered']
    #allocation6 [shape = 's32[1]{0}', space=sflag, size = 0x4, scoped, tag = 'scoped memory for tpu_custom_call.1']
    #allocation7 [shape = 'u8[8192]{0}', space=vmem, size = 0x2000, scoped, tag = 'output window, operand 0, single buffered']
    %7 = vsyncpa [#allocation3], 0
    %8 = vsyncpa [#allocation6], 0
    %9 = vsyncpa [#allocation4], 0
    // Predicated region
    $region2: #{tpu_custom_call.1} parent=1 // pred_check
      _
    $region3: #{tpu_custom_call.1} parent=1 // pred_check_branch
      %11 = sbr.rel (0) target = $region5
    $region4: #{tpu_custom_call.1} parent=1 // pred_region
      %13 = vsyncadd [#allocation3], 0
      %s15 = sshll.u32 %s0, 4
      %s16 = int_to_ptr.hbm [resolvable:$true] %s15
      %s17 = sshll.u32 [#allocation2], 4
      %s18 = int_to_ptr.vmem [resolvable:$true] %s17
      %20 = dma.hbm_to_vmem [thread:$0]  %s16, 256, %s18, [#allocation3]
    $region5: #{tpu_custom_call.1} parent=1 // pred_fallthru
      _
    // Predicated region
    $region6: #{tpu_custom_call.1} parent=1 // pred_check
      _
    $region7: #{tpu_custom_call.1} parent=1 // pred_check_branch
      %22 = sbr.rel (0) target = $region9
    $region8: #{tpu_custom_call.1} parent=1 // pred_region
      %24 = vsyncadd [#allocation6], 0
      %s26 = sshll.u32 %s1, 4
      %s27 = int_to_ptr.hbm [resolvable:$true] %s26
      %s28 = sshll.u32 [#allocation5], 4
      %s29 = int_to_ptr.vmem [resolvable:$true] %s28
      %31 = dma.hbm_to_vmem [thread:$0]  %s27, 256, %s29, [#allocation6]
    $region9: #{tpu_custom_call.1} parent=1 // pred_fallthru
      _
    // Predicated region
    $region10: #{tpu_custom_call.1} parent=1 // pred_check
      _
    $region11: #{tpu_custom_call.1} parent=1 // pred_check_branch
      %33 = sbr.rel (0) target = $region13
    $region12: #{tpu_custom_call.1} parent=1 // pred_region
      %35 = dma.done [#allocation3], 256
    $region13: #{tpu_custom_call.1} parent=1 // pred_fallthru
      _
    // Predicated region
    $region14: #{tpu_custom_call.1} parent=1 // pred_check
      _
    $region15: #{tpu_custom_call.1} parent=1 // pred_check_branch
      %37 = sbr.rel (0) target = $region17
    $region16: #{tpu_custom_call.1} parent=1 // pred_region
      %39 = dma.done [#allocation6], 256
    $region17: #{tpu_custom_call.1} parent=1 // pred_fallthru
      _
    %v40 = vld [vmem:[#allocation2] sm:$0xff]
    %v41 = vld [vmem:[#allocation2 + $0x8] sm:$0xff]
    %v42 = vld [vmem:[#allocation5] sm:$0xff]
    %v43 = vld [vmem:[#allocation5 + $0x8] sm:$0xff]
    %v44 = vadd.f32 %v40, %v42
    %v45 = vadd.f32 %v41, %v43
    %46 = vst [vmem:[#allocation7] sm:$0xff] %v44
    %47 = vst [vmem:[#allocation7 + $0x8] sm:$0xff] %v45
    // Predicated region
    $region18: #{tpu_custom_call.1} parent=1 // pred_check
      _
    $region19: #{tpu_custom_call.1} parent=1 // pred_check_branch
      %49 = sbr.rel (0) target = $region21
    $region20: #{tpu_custom_call.1} parent=1 // pred_region
      %51 = vsyncadd [#allocation4], 0
      %s53 = sshll.u32 [#allocation7], 4
      %s54 = int_to_ptr.vmem [resolvable:$true] %s53
      %s55 = sshll.u32 %s2, 4
      %s56 = int_to_ptr.hbm [resolvable:$true] %s55
      %58 = dma.vmem_to_hbm [thread:$0]  %s54, 256, %s56, [#allocation4]
    $region21: #{tpu_custom_call.1} parent=1 // pred_fallthru
      _
    // Predicated region
    $region22: #{tpu_custom_call.1} parent=1 // pred_check
      _
    $region23: #{tpu_custom_call.1} parent=1 // pred_check_branch
      %60 = sbr.rel (0) target = $region25
    $region24: #{tpu_custom_call.1} parent=1 // pred_region
      %62 = dma.done [#allocation4], 256
    $region25: #{tpu_custom_call.1} parent=1 // pred_fallthru
      _
    %63 = vsyncpa [#allocation3], 1
    %64 = vsyncpa [#allocation6], 1
    %65 = vsyncpa [#allocation4], 1

</llo_original>
